<compile_context>
chip_gen: v6e
topology: v6e:2x2x1
jax: 0.10.0
libtpu: 0.0.40
codegen_flags: <defaults>
</compile_context>

<pallas_src>
import functools

import jax
import jax.numpy as jnp
from jax.experimental import pallas as pl
from jax.experimental.pallas import tpu as pltpu

_LANES = 128
_DEFAULT_TM = 4096   # (4096, 128) f32 tile = 2 MiB: past the HBM-roofline knee,
                     # and the double-buffered footprint fits every chip's
                     # default scoped-VMEM limit (v5e 16 MiB .. v7x 32 MiB).


def _smooth_l1_partial_kernel(pred_ref, targ_ref, out_ref, acc_ref, *,
                              tm: int, m_rows: int, blocks_per_shard: int):
    p = pl.program_id(0)          # shard (parallel across TensorCores)
    k = pl.program_id(1)          # row-block within the shard (sequential)

    @pl.when(k == 0)
    def _init():
        acc_ref[...] = jnp.zeros_like(acc_ref)

    # Global row-block this step covers.  For "phantom" steps (only possible
    # on the last shard when blocks_total % num_shards != 0) valid_rows <= 0
    # and the whole tile is masked away; for the last real block only the
    # valid tail rows survive.
    b = p * blocks_per_shard + k
    valid_rows = m_rows - b * tm

    diff = pred_ref[...].astype(jnp.float32) - targ_ref[...].astype(jnp.float32)
    absd = jnp.abs(diff)
    loss = jnp.where(absd < 1.0, 0.5 * diff * diff, absd - 0.5)

    row_ids = jax.lax.broadcasted_iota(jnp.int32, (tm, _LANES), 0)
    acc_ref[...] += jnp.where(row_ids < valid_rows, loss, 0.0)

    @pl.when(k == pl.num_programs(1) - 1)
    def _finalize():
        out_ref[0, 0] = jnp.sum(acc_ref[...])


def ssim_loss(pred: jax.Array, target: jax.Array) -> jax.Array:
    """1 - mean(smooth_l1(pred - target)), computed in a Pallas TPU kernel."""
    assert pred.shape == target.shape
    n = int(pred.size)

    pf = pred.reshape(-1)
    tf = target.reshape(-1)

    # Only pad (a real HBM copy) in the rare case numel is not a multiple of
    # one f32 vreg (8 sublanes x 128 lanes).  Zero padding contributes exactly
    # 0 to the smooth-L1 sum and the mean is normalized by the original N.
    pad = (-n) % (8 * _LANES)
    if pad:
        pf = jnp.pad(pf, (0, pad))
        tf = jnp.pad(tf, (0, pad))

    m_rows = pf.shape[0] // _LANES          # multiple of 8
    pf = pf.reshape(m_rows, _LANES)
    tf = tf.reshape(m_rows, _LANES)

    tm = min(_DEFAULT_TM, m_rows)           # multiple of 8
    blocks_total = pl.cdiv(m_rows, tm)
    num_shards = 2 if blocks_total >= 2 else 1   # 2 TCs on v7x; harmless elsewhere
    blocks_per_shard = pl.cdiv(blocks_total, num_shards)
    grid = (num_shards, blocks_per_shard)

    def in_index_map(p, k):
        # Clamp so phantom steps never issue an out-of-bounds DMA; their rows
        # are masked to zero inside the kernel.
        return (jnp.minimum(p * blocks_per_shard + k, blocks_total - 1), 0)

    in_spec = pl.BlockSpec((tm, _LANES), in_index_map)
    out_spec = pl.BlockSpec((1, 1), lambda p, k: (p, 0),
                            memory_space=pltpu.MemorySpace.SMEM)

    kernel = functools.partial(
        _smooth_l1_partial_kernel,
        tm=tm, m_rows=m_rows, blocks_per_shard=blocks_per_shard)

    in_itemsize = pred.dtype.itemsize + target.dtype.itemsize
    cost = pl.CostEstimate(
        flops=8 * n,                 # sub, abs, 2*mul, sub, cmp, select, add
        transcendentals=0,
        bytes_accessed=n * in_itemsize + num_shards * 4)

    # Double-buffered input tiles + f32 accumulator, with headroom.
    vmem_need = 2 * tm * _LANES * in_itemsize + tm * _LANES * 4
    vmem_limit = min(64 * 1024 * 1024, vmem_need + 8 * 1024 * 1024)

    partials = pl.pallas_call(
        kernel,
        out_shape=jax.ShapeDtypeStruct((num_shards, 1), jnp.float32),
        grid=grid,
        in_specs=[in_spec, in_spec],
        out_specs=out_spec,
        scratch_shapes=[pltpu.VMEM((tm, _LANES), jnp.float32)],
        compiler_params=pltpu.CompilerParams(
            dimension_semantics=("parallel", "arbitrary"),
            vmem_limit_bytes=vmem_limit),
        cost_estimate=cost,
    )(pf, tf)

    return 1.0 - jnp.sum(partials) / jnp.float32(n)


def _reference(pred, target):
    diff = pred.astype(jnp.float32) - target.astype(jnp.float32)
    absd = jnp.abs(diff)
    loss = jnp.where(absd < 1.0, 0.5 * diff * diff, absd - 0.5)
    return 1.0 - jnp.mean(loss)


if __name__ == "__main__":
    key = jax.random.PRNGKey(0)
    k1, k2 = jax.random.split(key)
    # NCHW, as in the PyTorch training loop.
    pred = jax.random.normal(k1, (2, 4, 16, 16), dtype=jnp.float32)
    target = jax.random.normal(k2, (2, 4, 16, 16), dtype=jnp.float32)

    result = jax.block_until_ready(ssim_loss(pred, target))
    expected = jax.block_until_ready(_reference(pred, target))

    assert jnp.allclose(result, expected, rtol=1e-5, atol=1e-5), (result, expected)
    print("KERNEL_OK")
</pallas_src>

<mosaic_0001>
module attributes {stable_mosaic.version = 11 : i64} {
  func.func @_smooth_l1_partial_kernel(%arg0: i32, %arg1: i32, %arg2: memref<16x128xf32, #tpu.memory_space<vmem>>, %arg3: memref<16x128xf32, #tpu.memory_space<vmem>>, %arg4: memref<1x1xf32, #tpu.memory_space<smem>>, %arg5: memref<16x128xf32, #tpu.memory_space<vmem>>) attributes {dimension_semantics = [#tpu.dimension_semantics<parallel>, #tpu.dimension_semantics<arbitrary>], iteration_bounds = array<i64: 1, 1>, scalar_prefetch = 0 : i64, scratch_operands = 1 : i64, tpu.core_type = #tpu.core_type<tc>, window_params = [{transform_indices = @transform_0, window_bounds = array<i64: 16, 128>}, {transform_indices = @transform_1, window_bounds = array<i64: 16, 128>}, {transform_indices = @transform_2, window_bounds = array<i64: 1, 1>}]} {
    %c0_i32 = arith.constant 0 : i32
    %0 = arith.cmpi eq, %arg1, %c0_i32 : i32
    %1 = arith.extui %0 : i1 to i32
    %c0_i32_0 = arith.constant 0 : i32
    %2 = arith.cmpi ne, %1, %c0_i32_0 : i32
    scf.if %2 {
      %cst_14 = arith.constant 0.000000e+00 : f32
      %30 = vector.broadcast %cst_14 : f32 to vector<16x128xf32>
      %c0_15 = arith.constant 0 : index
      %c0_16 = arith.constant 0 : index
      %31 = vector.load %arg5[%c0_15, %c0_16] : memref<16x128xf32, #tpu.memory_space<vmem>>, vector<16x128xf32>
      tpu.vector_store %arg5[%c0_15, %c0_16], %30 {strides = array<i32>} : memref<16x128xf32, #tpu.memory_space<vmem>>, vector<16x128xf32>,
    } else {
    }
    %c1_i32 = arith.constant 1 : i32
    %3 = arith.muli %arg0, %c1_i32 : i32
    %4 = arith.addi %3, %arg1 : i32
    %c16_i32 = arith.constant 16 : i32
    %5 = arith.muli %4, %c16_i32 : i32
    %c16_i32_1 = arith.constant 16 : i32
    %6 = arith.subi %c16_i32_1, %5 : i32
    %c0 = arith.constant 0 : index
    %c0_2 = arith.constant 0 : index
    %7 = vector.load %arg2[%c0, %c0_2] : memref<16x128xf32, #tpu.memory_space<vmem>>, vector<16x128xf32>
    %c0_3 = arith.constant 0 : index
    %c0_4 = arith.constant 0 : index
    %8 = vector.load %arg3[%c0_3, %c0_4] : memref<16x128xf32, #tpu.memory_space<vmem>>, vector<16x128xf32>
    %9 = arith.subf %7, %8 : vector<16x128xf32>
    %10 = math.absf %9 : vector<16x128xf32>
    %cst = arith.constant 1.000000e+00 : f32
    %11 = vector.broadcast %cst : f32 to vector<16x128xf32>
    %12 = arith.cmpf olt, %10, %11 : vector<16x128xf32>
    %cst_5 = arith.constant 5.000000e-01 : f32
    %13 = vector.broadcast %cst_5 : f32 to vector<16x128xf32>
    %14 = arith.mulf %13, %9 : vector<16x128xf32>
    %15 = arith.mulf %14, %9 : vector<16x128xf32>
    %cst_6 = arith.constant 5.000000e-01 : f32
    %16 = vector.broadcast %cst_6 : f32 to vector<16x128xf32>
    %17 = arith.subf %10, %16 : vector<16x128xf32>
    %18 = arith.select %12, %15, %17 : vector<16x128xi1>, vector<16x128xf32>
    %19 = tpu.iota {dimensions = array<i32: 0>} : vector<16x128xi32>
    %c0_7 = arith.constant 0 : index
    %c0_8 = arith.constant 0 : index
    %20 = vector.load %arg5[%c0_7, %c0_8] : memref<16x128xf32, #tpu.memory_space<vmem>>, vector<16x128xf32>
    %21 = vector.broadcast %6 : i32 to vector<16x128xi32>
    %22 = arith.cmpi slt, %19, %21 : vector<16x128xi32>
    %cst_9 = arith.constant 0.000000e+00 : f32
    %23 = vector.broadcast %cst_9 : f32 to vector<16x128xf32>
    %24 = arith.select %22, %18, %23 : vector<16x128xi1>, vector<16x128xf32>
    %25 = arith.addf %20, %24 : vector<16x128xf32>
    %c0_10 = arith.constant 0 : index
    %c0_11 = arith.constant 0 : index
    %26 = vector.load %arg5[%c0_10, %c0_11] : memref<16x128xf32, #tpu.memory_space<vmem>>, vector<16x128xf32>
    tpu.vector_store %arg5[%c0_10, %c0_11], %25 {strides = array<i32>} : memref<16x128xf32, #tpu.memory_space<vmem>>, vector<16x128xf32>,
    %c0_i32_12 = arith.constant 0 : i32
    %27 = arith.cmpi eq, %arg1, %c0_i32_12 : i32
    %28 = arith.extui %27 : i1 to i32
    %c0_i32_13 = arith.constant 0 : i32
    %29 = arith.cmpi ne, %28, %c0_i32_13 : i32
    scf.if %29 {
      %c0_14 = arith.constant 0 : index
      %c0_15 = arith.constant 0 : index
      %30 = vector.load %arg5[%c0_14, %c0_15] : memref<16x128xf32, #tpu.memory_space<vmem>>, vector<16x128xf32>
      %31 = vector.shape_cast %30 : vector<16x128xf32> to vector<1x16x128xf32>
      %cst_16 = arith.constant dense<0.000000e+00> : vector<1xf32>
      %32 = vector.multi_reduction <add>, %31, %cst_16 [1, 2] : vector<1x16x128xf32> to vector<1xf32>
      %33 = vector.shape_cast %32 : vector<1xf32> to vector<1x1x1xf32>
      %34 = vector.extract %33[0, 0, 0] : f32 from vector<1x1x1xf32>
      %c0_17 = arith.constant 0 : index
      %c0_18 = arith.constant 0 : index
      %35 = memref.load %arg4[%c0_17, %c0_18] : memref<1x1xf32, #tpu.memory_space<smem>>
      memref.store %34, %arg4[%c0_17, %c0_18] : memref<1x1xf32, #tpu.memory_space<smem>>
    } else {
    }
    return
  }
  func.func @transform_0(%arg0: i32, %arg1: i32) -> (i32, i32) {
    %c1_i32 = arith.constant 1 : i32
    %0 = arith.muli %arg0, %c1_i32 : i32
    %1 = arith.addi %0, %arg1 : i32
    %c0_i32 = arith.constant 0 : i32
    %2 = arith.minsi %1, %c0_i32 : i32
    %c0_i32_0 = arith.constant 0 : i32
    %c0_i32_1 = arith.constant 0 : i32
    return %2, %c0_i32_0 : i32, i32
  }
  func.func @transform_1(%arg0: i32, %arg1: i32) -> (i32, i32) {
    %c1_i32 = arith.constant 1 : i32
    %0 = arith.muli %arg0, %c1_i32 : i32
    %1 = arith.addi %0, %arg1 : i32
    %c0_i32 = arith.constant 0 : i32
    %2 = arith.minsi %1, %c0_i32 : i32
    %c0_i32_0 = arith.constant 0 : i32
    %c0_i32_1 = arith.constant 0 : i32
    return %2, %c0_i32_0 : i32, i32
  }
  func.func @transform_2(%arg0: i32, %arg1: i32) -> (i32, i32) {
    %c0_i32 = arith.constant 0 : i32
    %c0_i32_0 = arith.constant 0 : i32
    return %arg0, %c0_i32 : i32, i32
  }
}

</mosaic_0001>

<llo_original>
// kernel: tpu_custom_call.1
$region0: #{tpu_custom_call.1}
  #allocation0 [shape = 'u32[]', space=smem, size = 0x4, offset = 0x4, fixed_abs, tag = 'smem constant byte address 0x4 - core index']
  #allocation1 [shape = 'u32[144,128]{1,0:T(1,128)}', space=vmem, size = 0x12000, scoped, tag = 'internal scratch']
  #allocation2 [shape = 'f32[16,128]{1,0:T(8,128)}', space=vmem, size = 0x2000, scoped, tag = 'scratch operand']
  %s0 = inlined_call_operand.hbm [shape: f32[16,128], index: 0, kind: input, shape index: {}]
  %s1 = inlined_call_operand.hbm [shape: f32[16,128], index: 1, kind: input, shape index: {}]
  %s2 = inlined_call_operand.hbm [shape: f32[1,1], index: 2, kind: output, shape index: {}]
  %s3 = sld [smem:[#allocation0]]
  $region34: #{tpu_custom_call.1} parent=0
    _
  %s5 = ssub.s32 1, %s3
  %s6 = scalar_select 0, %s5, %s3
  $region1: #{tpu_custom_call.1} parent=0
    #allocation3 [shape = 'u8[8192]{0}', space=vmem, size = 0x2000, scoped, tag = 'input window, operand 0, single buffered']
    #allocation4 [shape = 's32[1]{0}', space=sflag, size = 0x4, scoped, tag = 'scoped memory for tpu_custom_call.1']
    #allocation5 [shape = 's32[1]{0}', space=sflag, size = 0x4, scoped, tag = 'scoped memory for tpu_custom_call.1']
    #allocation6 [shape = 'u8[8192]{0}', space=vmem, size = 0x2000, scoped, tag = 'input window, operand 1, single buffered']
    #allocation7 [shape = 's32[1]{0}', space=sflag, size = 0x4, scoped, tag = 'scoped memory for tpu_custom_call.1']
    #allocation8 [shape = 'u8[512]{0}', space=smem, size = 0x200, scoped, tag = 'output window, operand 0, single buffered']
    %7 = vsyncpa [#allocation4], 0
    %8 = vsyncpa [#allocation7], 0
    %9 = vsyncpa [#allocation5], 0
    // Predicated region
    $region2: #{tpu_custom_call.1} parent=1 // pred_check
      _
    $region3: #{tpu_custom_call.1} parent=1 // pred_check_branch
      %11 = sbr.rel (0) target = $region5
    $region4: #{tpu_custom_call.1} parent=1 // pred_region
      %s12 = sadd.s32 0, 0
      %p13 = scmp.lt.s32.totalorder %s12, 0
      %s14 = scalar_select %p13, %s12, 0
      %s15 = smul.u32 2, %s14
      %s17 = ssub.s32 256, 256
      %18 = vsyncadd [#allocation4], %s17
      %s19 = smul.addr %s15, 128
      %s20 = scalar_lea.hbm %s0, %s19
      %s21 = sshll.u32 [#allocation3], 4
      %s22 = int_to_ptr.vmem [resolvable:$true] %s21
      %27 = dma.hbm_to_vmem [thread:$0]  %s20, 256, %s22, [#allocation4], 128, 128, 8
    $region5: #{tpu_custom_call.1} parent=1 // pred_fallthru
      _
    // Predicated region
    $region6: #{tpu_custom_call.1} parent=1 // pred_check
      _
    $region7: #{tpu_custom_call.1} parent=1 // pred_check_branch
      %29 = sbr.rel (0) target = $region9
    $region8: #{tpu_custom_call.1} parent=1 // pred_region
      %s30 = sadd.s32 0, 0
      %p31 = scmp.lt.s32.totalorder %s30, 0
      %s32 = scalar_select %p31, %s30, 0
      %s33 = smul.u32 2, %s32
      %s35 = ssub.s32 256, 256
      %36 = vsyncadd [#allocation7], %s35
      %s37 = smul.addr %s33, 128
      %s38 = scalar_lea.hbm %s1, %s37
      %s39 = sshll.u32 [#allocation6], 4
      %s40 = int_to_ptr.vmem [resolvable:$true] %s39
      %45 = dma.hbm_to_vmem [thread:$0]  %s38, 256, %s40, [#allocation7], 128, 128, 8
    $region9: #{tpu_custom_call.1} parent=1 // pred_fallthru
      _
    // Predicated region
    $region10: #{tpu_custom_call.1} parent=1 // pred_check
      _
    $region11: #{tpu_custom_call.1} parent=1 // pred_check_branch
      %47 = sbr.rel (0) target = $region13
    $region12: #{tpu_custom_call.1} parent=1 // pred_region
      %48 = dma.done [#allocation4], 256
    $region13: #{tpu_custom_call.1} parent=1 // pred_fallthru
      _
    // Predicated region
    $region14: #{tpu_custom_call.1} parent=1 // pred_check
      _
    $region15: #{tpu_custom_call.1} parent=1 // pred_check_branch
      %50 = sbr.rel (0) target = $region17
    $region16: #{tpu_custom_call.1} parent=1 // pred_region
      %51 = dma.done [#allocation7], 256
    $region17: #{tpu_custom_call.1} parent=1 // pred_fallthru
      _
    %s52 = sadd.s32 0, 0
    %p53 = scmp.lt.s32.totalorder %s52, 0
    %s54 = scalar_select %p53, %s52, 0
    %s55 = smul.u32 2, %s54
    %s56 = sadd.s32 0, 0
    %p57 = scmp.lt.s32.totalorder %s56, 0
    %s58 = scalar_select %p57, %s56, 0
    %s59 = smul.u32 2, %s58
    %p60 = scmp.eq.s32.totalorder 0, 0
    // Predicated region
    $region18: #{tpu_custom_call.1} parent=1 // pred_check
      %p61 = pneg %p60
    $region19: #{tpu_custom_call.1} parent=1 // pred_check_branch
      %63 = sbr.rel (%p61) target = $region21
    $region20: #{tpu_custom_call.1} parent=1 // pred_region
      %64 = vst [vmem:[#allocation2] sm:$0xff] 0.0
      %65 = vst [vmem:[#allocation2 + $0x8] sm:$0xff] 0.0
    $region21: #{tpu_custom_call.1} parent=1 // pred_fallthru
      _
    %s66 = sadd.s32 0, 0
    %s67 = smul.u32 %s66, 16
    %s68 = ssub.s32 16, %s67
    %v69 = vld [vmem:[#allocation3] sm:$0xff]
    %v70 = vld [vmem:[#allocation3 + $0x8] sm:$0xff]
    %v71 = vld [vmem:[#allocation6] sm:$0xff]
    %v72 = vld [vmem:[#allocation6 + $0x8] sm:$0xff]
    %v73 = vsub.f32 %v69, %v71
    %v74 = vsub.f32 %v70, %v72
    %v75 = vand.u32 2147483647, %v73
    %v76 = vand.u32 2147483647, %v74
    %vm77 = vcmp.lt.f32.partialorder %v75, 1.0
    %vm78 = vcmp.lt.f32.partialorder %v76, 1.0
    %v79 = vmul.f32 %v73, 0.5
    %v80 = vmul.f32 %v74, 0.5
    %v81 = vmul.f32 %v79, %v73
    %v82 = vmul.f32 %v80, %v74
    %v83 = vsub.f32 %v75, 0.5
    %v84 = vsub.f32 %v76, 0.5
    %v85 = vsel %vm77, %v81, %v83
    %v86 = vsel %vm78, %v82, %v84
    %v87 = vlaneseq
    %v88 = vshrl.u32 %v87, 7
    %v89 = vadd.s32 %v88, 8
    %v90 = vld [vmem:[#allocation2] sm:$0xff]
    %v91 = vld [vmem:[#allocation2 + $0x8] sm:$0xff]
    %v92 = vstv %s68
    %vm93 = vcmp.lt.s32.totalorder %v88, %v92
    %vm94 = vcmp.lt.s32.totalorder %v89, %v92
    %v95 = vsel %vm93, %v85, 0.0
    %v96 = vsel %vm94, %v86, 0.0
    %v97 = vadd.f32 %v90, %v95
    %v98 = vadd.f32 %v91, %v96
    %99 = vst [vmem:[#allocation2] sm:$0xff] %v97
    %100 = vst [vmem:[#allocation2 + $0x8] sm:$0xff] %v98
    // Predicated region
    $region22: #{tpu_custom_call.1} parent=1 // pred_check
      %p101 = pneg %p60
    $region23: #{tpu_custom_call.1} parent=1 // pred_check_branch
      %103 = sbr.rel (%p101) target = $region25
    $region24: #{tpu_custom_call.1} parent=1 // pred_region
      %v104 = vld [vmem:[#allocation2] sm:$0xff]
      %v105 = vld [vmem:[#allocation2 + $0x8] sm:$0xff]
      %v106 = vadd.f32 %v104, %v105
      %107 = vadd.xlane.f32.xlu0 %v106
      %v108 = vpop.xlane.xlu0 %107
      %v109 = vrot.slane %v108, 4
      %v110 = vadd.f32 %v108, %v109
      %v111 = vrot.slane %v110, 2
      %v112 = vadd.f32 %v110, %v111
      %v113 = vrot.slane %v112, 1
      %v114 = vadd.f32 %v112, %v113
      %s115 = vtos %v114
      %s116 = scalar_lea.smem [#allocation8], 0
      %117 = sst [smem:[%s116]] %s115
    $region25: #{tpu_custom_call.1} parent=1 // pred_fallthru
      _
    // Predicated region
    $region26: #{tpu_custom_call.1} parent=1 // pred_check
      _
    $region27: #{tpu_custom_call.1} parent=1 // pred_check_branch
      %119 = sbr.rel (0) target = $region29
    $region28: #{tpu_custom_call.1} parent=1 // pred_region
      %s121 = ssub.s32 16, 16
      %122 = vsyncadd [#allocation5], %s121
      %125 = dma.smem_to_hbm [#allocation8], 16, %s2, [#allocation5]
    $region29: #{tpu_custom_call.1} parent=1 // pred_fallthru
      _
    // Predicated region
    $region30: #{tpu_custom_call.1} parent=1 // pred_check
      _
    $region31: #{tpu_custom_call.1} parent=1 // pred_check_branch
      %127 = sbr.rel (0) target = $region33
    $region32: #{tpu_custom_call.1} parent=1 // pred_region
      %128 = dma.done [#allocation5], 16
    $region33: #{tpu_custom_call.1} parent=1 // pred_fallthru
      _
    %129 = sfence
    %130 = vsyncpa [#allocation4], 1
    %131 = vsyncpa [#allocation7], 1
    %132 = vsyncpa [#allocation5], 1

</llo_original>
